<compile_context>
chip_gen: v6e
topology: v6e:2x2x1
jax: 0.10.0
libtpu: 0.0.40
codegen_flags: <defaults>
</compile_context>

<pallas_src>
import functools
import math

import jax
import jax.numpy as jnp
from jax import lax
from jax.experimental import pallas as pl
from jax.experimental.pallas import tpu as pltpu

_LANE = 512              # lane-dense last dim (multiple of 128) -> unmasked stores
_HALF_LANE = _LANE // 2  # 256: lane-aligned split for the cos/sin Box-Muller halves
_TILE_ROWS = 1024        # (1024, 512) f32 block = 2 MiB; in+out double-buffered = 8 MiB
_INV_2_24 = 1.0 / (1 << 24)


def _round_up(a, b):
    return ((a + b - 1) // b) * b


def _awgn_prng_kernel(seed_ref, x_ref, o_ref, *, std):
    # Scramble the per-tile seed so adjacent grid steps don't hand consecutive
    # integers to the hardware PRNG (weakly correlated streams).
    pid = pl.program_id(0)
    mixed = (seed_ref[0] * jnp.int32(-1640531527)          # golden-ratio odd constant
             + (pid + jnp.int32(1)) * jnp.int32(1103515245))
    pltpu.prng_seed(mixed)

    rows = x_ref.shape[0]
    # One PRNG draw + one shared bitcast/shift/int->f32 chain for the whole tile.
    bits = pltpu.bitcast(pltpu.prng_random_bits((rows, _LANE)), jnp.int32)
    b24 = lax.shift_right_logical(bits, jnp.int32(8)).astype(jnp.float32)

    # Paired-output Box-Muller over the lane axis:
    #   u1 in (0, 1]  -> log finite;  theta in [0, 2*pi), pre-scaled from bits.
    u1 = 1.0 - b24[:, :_HALF_LANE] * jnp.float32(_INV_2_24)
    theta = b24[:, _HALF_LANE:] * jnp.float32(2.0 * math.pi * _INV_2_24)
    # std folded into the radius: std*sqrt(-2*log u1) = sqrt((-2*std^2)*log u1).
    r = jnp.sqrt(jnp.float32(-2.0 * std * std) * jnp.log(u1))

    x = x_ref[...]
    o_ref[:, :_HALF_LANE] = x[:, :_HALF_LANE] + (r * jnp.cos(theta)).astype(o_ref.dtype)
    o_ref[:, _HALF_LANE:] = x[:, _HALF_LANE:] + (r * jnp.sin(theta)).astype(o_ref.dtype)


def _awgn_add_kernel(x_ref, n_ref, o_ref, *, std):
    # Fallback path: noise drawn outside the kernel (non-TPU backends).
    o_ref[...] = x_ref[...] + (std * n_ref[...]).astype(o_ref.dtype)


def awgn(x, seed, *, N):
    """Adds Gaussian noise with std = sqrt(N / 2) to x (matches AWGN.forward)."""
    std = math.sqrt(N / 2.0)
    orig_shape = x.shape
    orig_dtype = x.dtype

    total = x.size
    rows = pl.cdiv(total, _LANE)
    padded = rows * _LANE
    flat = jnp.ravel(x)
    if padded != total:
        # Only for ragged sizes; typical NCHW feature maps divide evenly.
        flat = jnp.pad(flat, (0, padded - total))
    x2 = flat.reshape(rows, _LANE)

    # Tile-size policy (see header): full extent / 2-way split for v7x / 1024-row tiles.
    if rows <= 8:
        tile_rows = rows
    elif rows <= 2 * _TILE_ROWS:
        tile_rows = min(_round_up(pl.cdiv(rows, 2), 8), _TILE_ROWS)
    else:
        tile_rows = _TILE_ROWS
    grid = (pl.cdiv(rows, tile_rows),)

    if jax.default_backend() == "tpu":
        seed_arr = jnp.asarray([seed], dtype=jnp.int32)
        block = pl.BlockSpec((tile_rows, _LANE), lambda i, seed_ref: (i, 0))
        cost = pl.CostEstimate(
            flops=8 * x2.size,
            transcendentals=2 * x2.size,   # (log+sqrt)/2 + (cos or sin) per element
            bytes_accessed=2 * x2.size * x2.dtype.itemsize,
        )
        out2 = pl.pallas_call(
            functools.partial(_awgn_prng_kernel, std=std),
            out_shape=jax.ShapeDtypeStruct(x2.shape, orig_dtype),
            grid_spec=pltpu.PrefetchScalarGridSpec(
                num_scalar_prefetch=1,       # seed lands in SMEM before the grid runs
                grid=grid,
                in_specs=[block],
                out_specs=block,
            ),
            compiler_params=pltpu.CompilerParams(
                dimension_semantics=("parallel",),
                vmem_limit_bytes=32 * 1024 * 1024,
            ),
            cost_estimate=cost,
        )(seed_arr, x2)
    else:
        # TODO(synk): pltpu.prng_seed / prng_random_bits have no lowering off-TPU;
        # draw the noise with jax.random and keep only the tiled add in-kernel.
        block = pl.BlockSpec((tile_rows, _LANE), lambda i: (i, 0))
        noise = jax.random.normal(jax.random.PRNGKey(seed), x2.shape, jnp.float32)
        out2 = pl.pallas_call(
            functools.partial(_awgn_add_kernel, std=std),
            out_shape=jax.ShapeDtypeStruct(x2.shape, orig_dtype),
            grid=grid,
            in_specs=[block, block],
            out_specs=block,
        )(x2, noise)

    out_flat = out2.reshape(-1)
    if padded != total:
        out_flat = out_flat[:total]
    return out_flat.reshape(orig_shape)


if __name__ == "__main__":
    key = jax.random.PRNGKey(0)
    # Small NCHW input consistent with a conv-style VAE feature map.
    x = jax.random.normal(key, (2, 4, 16, 16), dtype=jnp.float32)

    k = 16    # stored by the PyTorch module; unused in forward
    N = 0.1   # noise power -> std = sqrt(N / 2) ~ 0.2236

    y = awgn(x, seed=0, N=N)
    jax.block_until_ready(y)

    assert y.shape == x.shape and y.dtype == x.dtype
    diff = y - x
    assert bool(jnp.all(jnp.isfinite(diff)))
    assert bool(jnp.any(jnp.abs(diff) > 0.0))
    # Sample std of the injected noise should be in the right ballpark of 0.2236.
    s = float(jnp.std(diff))
    assert 0.05 < s < 1.0, s

    print("KERNEL_OK")
</pallas_src>

<mosaic_0001>
module attributes {stable_mosaic.version = 11 : i64} {
  func.func @_awgn_add_kernel(%arg0: i32, %arg1: memref<4x512xf32, #tpu.memory_space<vmem>>, %arg2: memref<4x512xf32, #tpu.memory_space<vmem>>, %arg3: memref<4x512xf32, #tpu.memory_space<vmem>>) attributes {dimension_semantics = [#tpu.dimension_semantics<arbitrary>], iteration_bounds = array<i64: 1>, scalar_prefetch = 0 : i64, scratch_operands = 0 : i64, tpu.core_type = #tpu.core_type<tc>, window_params = [{transform_indices = @transform_0, window_bounds = array<i64: 4, 512>}, {transform_indices = @transform_1, window_bounds = array<i64: 4, 512>}, {transform_indices = @transform_2, window_bounds = array<i64: 4, 512>}]} {
    %c0 = arith.constant 0 : index
    %c0_0 = arith.constant 0 : index
    %0 = vector.load %arg1[%c0, %c0_0] : memref<4x512xf32, #tpu.memory_space<vmem>>, vector<4x512xf32>
    %c0_1 = arith.constant 0 : index
    %c0_2 = arith.constant 0 : index
    %1 = vector.load %arg2[%c0_1, %c0_2] : memref<4x512xf32, #tpu.memory_space<vmem>>, vector<4x512xf32>
    %cst = arith.constant 0.223606795 : f32
    %2 = vector.broadcast %cst : f32 to vector<4x512xf32>
    %3 = arith.mulf %2, %1 : vector<4x512xf32>
    %4 = arith.addf %0, %3 : vector<4x512xf32>
    %c0_3 = arith.constant 0 : index
    %c0_4 = arith.constant 0 : index
    %5 = vector.load %arg3[%c0_3, %c0_4] : memref<4x512xf32, #tpu.memory_space<vmem>>, vector<4x512xf32>
    tpu.vector_store %arg3[%c0_3, %c0_4], %4 {strides = array<i32>} : memref<4x512xf32, #tpu.memory_space<vmem>>, vector<4x512xf32>,
    return
  }
  func.func @transform_0(%arg0: i32) -> (i32, i32) {
    %c0_i32 = arith.constant 0 : i32
    %c0_i32_0 = arith.constant 0 : i32
    return %arg0, %c0_i32 : i32, i32
  }
  func.func @transform_1(%arg0: i32) -> (i32, i32) {
    %c0_i32 = arith.constant 0 : i32
    %c0_i32_0 = arith.constant 0 : i32
    return %arg0, %c0_i32 : i32, i32
  }
  func.func @transform_2(%arg0: i32) -> (i32, i32) {
    %c0_i32 = arith.constant 0 : i32
    %c0_i32_0 = arith.constant 0 : i32
    return %arg0, %c0_i32 : i32, i32
  }
}

</mosaic_0001>

<llo_original>
// kernel: tpu_custom_call.1
$region0: #{tpu_custom_call.1}
  #allocation0 [shape = 'u32[]', space=smem, size = 0x4, offset = 0x4, fixed_abs, tag = 'smem constant byte address 0x4 - core index']
  #allocation1 [shape = 'u32[144,128]{1,0:T(1,128)}', space=vmem, size = 0x12000, scoped, tag = 'internal scratch']
  %s0 = inlined_call_operand.hbm [shape: f32[4,512], index: 0, kind: input, shape index: {}]
  %s1 = inlined_call_operand.hbm [shape: f32[4,512], index: 1, kind: input, shape index: {}]
  %s2 = inlined_call_operand.hbm [shape: f32[4,512], index: 2, kind: output, shape index: {}]
  %s3 = sld [smem:[#allocation0]]
  $region26: #{tpu_custom_call.1} parent=0
    _
  %s5 = ssub.s32 1, %s3
  %s6 = scalar_select 0, %s5, %s3
  $region1: #{tpu_custom_call.1} parent=0
    #allocation2 [shape = 'u8[8192]{0}', space=vmem, size = 0x2000, scoped, tag = 'input window, operand 0, single buffered']
    #allocation3 [shape = 's32[1]{0}', space=sflag, size = 0x4, scoped, tag = 'scoped memory for tpu_custom_call.1']
    #allocation4 [shape = 's32[1]{0}', space=sflag, size = 0x4, scoped, tag = 'scoped memory for tpu_custom_call.1']
    #allocation5 [shape = 'u8[8192]{0}', space=vmem, size = 0x2000, scoped, tag = 'input window, operand 1, single buffered']
    #allocation6 [shape = 's32[1]{0}', space=sflag, size = 0x4, scoped, tag = 'scoped memory for tpu_custom_call.1']
    #allocation7 [shape = 'u8[8192]{0}', space=vmem, size = 0x2000, scoped, tag = 'output window, operand 0, single buffered']
    %7 = vsyncpa [#allocation3], 0
    %8 = vsyncpa [#allocation6], 0
    %9 = vsyncpa [#allocation4], 0
    // Predicated region
    $region2: #{tpu_custom_call.1} parent=1 // pred_check
      _
    $region3: #{tpu_custom_call.1} parent=1 // pred_check_branch
      %11 = sbr.rel (0) target = $region5
    $region4: #{tpu_custom_call.1} parent=1 // pred_region
      %s13 = ssub.s32 256, 256
      %14 = vsyncadd [#allocation3], %s13
      %s16 = sshll.u32 [#allocation2], 4
      %s17 = int_to_ptr.vmem [resolvable:$true] %s16
      %19 = dma.hbm_to_vmem [thread:$0]  %s0, 256, %s17, [#allocation3]
    $region5: #{tpu_custom_call.1} parent=1 // pred_fallthru
      _
    // Predicated region
    $region6: #{tpu_custom_call.1} parent=1 // pred_check
      _
    $region7: #{tpu_custom_call.1} parent=1 // pred_check_branch
      %21 = sbr.rel (0) target = $region9
    $region8: #{tpu_custom_call.1} parent=1 // pred_region
      %s23 = ssub.s32 256, 256
      %24 = vsyncadd [#allocation6], %s23
      %s26 = sshll.u32 [#allocation5], 4
      %s27 = int_to_ptr.vmem [resolvable:$true] %s26
      %29 = dma.hbm_to_vmem [thread:$0]  %s1, 256, %s27, [#allocation6]
    $region9: #{tpu_custom_call.1} parent=1 // pred_fallthru
      _
    // Predicated region
    $region10: #{tpu_custom_call.1} parent=1 // pred_check
      _
    $region11: #{tpu_custom_call.1} parent=1 // pred_check_branch
      %31 = sbr.rel (0) target = $region13
    $region12: #{tpu_custom_call.1} parent=1 // pred_region
      %32 = dma.done [#allocation3], 256
    $region13: #{tpu_custom_call.1} parent=1 // pred_fallthru
      _
    // Predicated region
    $region14: #{tpu_custom_call.1} parent=1 // pred_check
      _
    $region15: #{tpu_custom_call.1} parent=1 // pred_check_branch
      %34 = sbr.rel (0) target = $region17
    $region16: #{tpu_custom_call.1} parent=1 // pred_region
      %35 = dma.done [#allocation6], 256
    $region17: #{tpu_custom_call.1} parent=1 // pred_fallthru
      _
    %v36 = vld [vmem:[#allocation2] sm:$0xff]
    %v37 = vld [vmem:[#allocation2 + $0x8] sm:$0xff]
    %v38 = vld [vmem:[#allocation5] sm:$0xff]
    %v39 = vld [vmem:[#allocation5 + $0x8] sm:$0xff]
    %v40 = vmul.f32 %v38, 0.2236068
    %v41 = vmul.f32 %v39, 0.2236068
    %v42 = vadd.f32 %v36, %v40
    %v43 = vadd.f32 %v37, %v41
    %44 = vst [vmem:[#allocation7] sm:$0xff] %v42
    %45 = vst [vmem:[#allocation7 + $0x8] sm:$0xff] %v43
    // Predicated region
    $region18: #{tpu_custom_call.1} parent=1 // pred_check
      _
    $region19: #{tpu_custom_call.1} parent=1 // pred_check_branch
      %47 = sbr.rel (0) target = $region21
    $region20: #{tpu_custom_call.1} parent=1 // pred_region
      %s49 = ssub.s32 256, 256
      %50 = vsyncadd [#allocation4], %s49
      %s52 = sshll.u32 [#allocation7], 4
      %s53 = int_to_ptr.vmem [resolvable:$true] %s52
      %55 = dma.vmem_to_hbm [thread:$0]  %s53, 256, %s2, [#allocation4]
    $region21: #{tpu_custom_call.1} parent=1 // pred_fallthru
      _
    // Predicated region
    $region22: #{tpu_custom_call.1} parent=1 // pred_check
      _
    $region23: #{tpu_custom_call.1} parent=1 // pred_check_branch
      %57 = sbr.rel (0) target = $region25
    $region24: #{tpu_custom_call.1} parent=1 // pred_region
      %58 = dma.done [#allocation4], 256
    $region25: #{tpu_custom_call.1} parent=1 // pred_fallthru
      _
    %59 = vsyncpa [#allocation3], 1
    %60 = vsyncpa [#allocation6], 1
    %61 = vsyncpa [#allocation4], 1

</llo_original>
